<compile_context>
chip_gen: v7x
topology: tpu7x:2x2x1
jax: 0.10.0
libtpu: 0.0.40
codegen_flags: <defaults>
</compile_context>

<pallas_src>
import functools

import jax
import jax.numpy as jnp
from jax import lax
from jax.experimental import pallas as pl
from jax.experimental.pallas import tpu as pltpu


def _round_up(x, m):
    return ((x + m - 1) // m) * m


def _cdiv(a, b):
    return (a + b - 1) // b


def _has_bf16_vpu():
    # v6e / v7x have bf16-capable VPU+EUP; v5e and older do not.
    try:
        kind = jax.devices()[0].device_kind.lower()
    except Exception:
        return False
    return any(tag in kind for tag in ("v6", "v7", "trillium"))


def _elu(x):
    # ELU, alpha=1.0 (PyTorch default).
    # exp(x) - 1 (not expm1) to stay within guaranteed Mosaic lowering
    # coverage; the precision delta near 0 is negligible for this forward.
    return jnp.where(x > 0, x, jnp.exp(x) - 1.0)


def _logsigmoid(x):
    # Numerically stable log(sigmoid(x)) = min(x, 0) - log1p(exp(-|x|))
    return jnp.minimum(x, 0.0) - jnp.log1p(jnp.exp(-jnp.abs(x)))


def _mlp_kernel(num_hidden, compute_dtype, ew_dtype, x_ref, *refs):
    """refs = (W0, b0, ..., W_h, b_h, w_out, b_out, out_ref).

    W_i   : (d_out, d_in)   matmul dtype (f32 or bf16), PyTorch-native layout
    b_i   : (d_out, 1)      f32 (broadcast along lanes)
    out   : (1, TILE_B)     f32 lane-dense row of logsigmoid values

    Activations are kept batch-in-lanes: h has shape (d_out, TILE_B), so the
    narrow hidden widths use all 128 lanes in the ELU chain and the final
    Linear(->1) yields a lane-dense (1, TILE_B) row (unmasked stores).
    """
    out_ref = refs[-1]
    p = refs[:-1]

    # ---- Layer 0: contract x's feature dim directly from its HBM layout.
    #      (d0, d_in) . (TILE_B, d_in) over d_in  ->  (d0, TILE_B)
    x = x_ref[...]                                       # (TILE_B, d_in)
    w = p[0][...]                                        # (d0, d_in)
    b = p[1][...]                                        # (d0, 1) f32
    z = lax.dot_general(w, x.astype(w.dtype), (((1,), (1,)), ((), ())),
                        preferred_element_type=jnp.float32) + b

    # ---- Layers 1..num_hidden: ELU on the previous pre-activation, then a
    #      plain (d_out, d_prev) @ (d_prev, TILE_B) matmul.  Layer num_hidden
    #      is the output Linear(->1); ELU is only applied after hidden layers.
    for li in range(1, num_hidden + 1):
        h = _elu(z.astype(ew_dtype)).astype(compute_dtype)   # (d_prev, TILE_B)
        w = p[2 * li][...]                               # (d_out, d_prev)
        b = p[2 * li + 1][...]                           # (d_out, 1) f32
        z = jnp.dot(w, h, preferred_element_type=jnp.float32) + b

    # z: output-layer pre-activation, (1, TILE_B), f32. LogSigmoid in f32.
    out_ref[...] = _logsigmoid(z).astype(out_ref.dtype)


def _choose_tiling(B, d_in, hidden_dims, *, x_itemsize, compute_itemsize,
                   tile_b_cap, vmem_budget_bytes):
    """Pick (tile_b, num_tiles, b_pad, per-tile VMEM footprint estimate)."""
    LANE, SUB = 128, 8
    b128 = _round_up(max(B, 1), LANE)

    # Conservative per-batch-row VMEM bytes: double-buffered x input block
    # (plus its in-kernel cast copy), per-layer f32 pre-activation +
    # compute-dtype activation temps (batch-in-lanes, so only the feature dim
    # pads -- to 8 sublanes), and the double-buffered 8-sublane output block.
    d_in_lanes = _round_up(max(d_in, 1), LANE)
    per_row = 2 * d_in_lanes * x_itemsize
    per_row += d_in_lanes * compute_itemsize
    for d in hidden_dims:
        per_row += _round_up(max(d, 1), SUB) * (4 + compute_itemsize)
    per_row += 2 * SUB * 4

    cap = (vmem_budget_bytes // per_row) // LANE * LANE
    cap = max(LANE, min(_round_up(max(tile_b_cap, 1), LANE), cap))

    num_tiles = _cdiv(b128, cap)
    # Give megacore (v7x: 2 TensorCores) a parallel axis to split once there
    # is enough work; the extra grid step costs ~0.35us on single-core chips.
    if num_tiles == 1 and b128 >= 2048:
        num_tiles = 2
    if num_tiles > 1 and num_tiles % 2 == 1:
        num_tiles += 1

    tile_b = _round_up(_cdiv(b128, num_tiles), LANE)
    b_pad = tile_b * num_tiles
    return tile_b, num_tiles, b_pad, per_row * tile_b


def loglikelihood_mlp_forward(x, params, *, tile_b=8192,
                              compute_dtype=jnp.float32,
                              vmem_budget_bytes=24 * 1024 * 1024):
    """Fused forward pass.

    x:      [B, input_dim]
    params: list of (W (out, in), b (out,)) pairs (PyTorch nn.Linear layout);
            the last pair has out == 1.
    """
    B, d_in = x.shape
    num_hidden = len(params) - 1
    hidden_dims = [int(w.shape[0]) for (w, _) in params[:-1]]
    compute_dtype = jnp.dtype(compute_dtype)

    # bf16 elementwise only where the VPU/EUP supports it (v6e / v7x); v5e and
    # older keep the ELU chain in f32.
    if compute_dtype == jnp.dtype(jnp.bfloat16) and _has_bf16_vpu():
        ew_dtype = jnp.dtype(jnp.bfloat16)
    else:
        ew_dtype = jnp.dtype(jnp.float32)

    tile_bs, num_tiles, b_pad, footprint = _choose_tiling(
        B, d_in, hidden_dims,
        x_itemsize=x.dtype.itemsize,
        compute_itemsize=compute_dtype.itemsize,
        tile_b_cap=tile_b,
        vmem_budget_bytes=vmem_budget_bytes)

    # Pad only to what the chosen tiling needs (128-aligned), with zeros so
    # padded rows flow harmlessly through exp() and are sliced off at the end.
    x_p = x if b_pad == B else jnp.pad(x, ((0, b_pad - B), (0, 0)))

    const_map = lambda i: (0, 0)
    in_specs = [pl.BlockSpec((tile_bs, d_in), lambda i: (i, 0))]
    flat = []
    for (w, b) in params:
        w = jnp.asarray(w, compute_dtype)                 # (d_out, d_in)
        b = jnp.asarray(b, jnp.float32).reshape(-1, 1)    # (d_out, 1)
        flat += [w, b]
        # Constant index_map keeps weights/biases VMEM-resident across tiles.
        # (Params are tiny here; for very wide layers one could additionally
        # drop their second pipeline buffer with pipeline_mode=pl.Buffered(1).)
        in_specs.append(pl.BlockSpec(w.shape, const_map))
        in_specs.append(pl.BlockSpec(b.shape, const_map))

    kernel = functools.partial(_mlp_kernel, num_hidden, compute_dtype, ew_dtype)

    # Advisory cost estimate (helps XLA schedule surrounding ops).
    dims = [d_in] + hidden_dims + [1]
    flops = 2 * b_pad * sum(dims[i] * dims[i + 1] for i in range(len(dims) - 1))
    transcendentals = b_pad * (sum(hidden_dims) + 2)
    bytes_accessed = (x_p.size * x_p.dtype.itemsize
                      + sum(a.size * a.dtype.itemsize for a in flat)
                      + b_pad * 4)

    # VMEM limit from the actual footprint plus headroom (not a blanket 48 MiB,
    # which would be 75% of a v7x TensorCore's 64 MiB).
    params_bytes = sum(a.size * a.dtype.itemsize for a in flat)
    vmem_limit = int(1.5 * (footprint + 2 * params_bytes)) + 8 * 1024 * 1024

    out = pl.pallas_call(
        kernel,
        grid=(num_tiles,),
        in_specs=in_specs,
        out_specs=pl.BlockSpec((1, tile_bs), lambda i: (0, i)),
        out_shape=jax.ShapeDtypeStruct((1, b_pad), jnp.float32),
        compiler_params=pltpu.CompilerParams(
            dimension_semantics=("parallel",),
            vmem_limit_bytes=vmem_limit,
        ),
        cost_estimate=pl.CostEstimate(
            flops=flops,
            transcendentals=transcendentals,
            bytes_accessed=bytes_accessed,
        ),
    )(x_p, *flat)

    # Lane-dense (1, B_pad) slab -> (B, 1) column (row-major reshape, no transpose).
    return out.reshape(b_pad, 1)[:B]


def init_params(key, input_dim, layers_config):
    """Deterministic init mirroring nn.Linear ((out, in) weight, (out,) bias)."""
    dims = [input_dim] + list(layers_config) + [1]
    params = []
    for i in range(len(dims) - 1):
        d_in, d_out = dims[i], dims[i + 1]
        key, kw, kb = jax.random.split(key, 3)
        bound = 1.0 / (d_in ** 0.5)
        w = jax.random.uniform(kw, (d_out, d_in), jnp.float32, -bound, bound)
        b = jax.random.uniform(kb, (d_out,), jnp.float32, -bound, bound)
        params.append((w, b))
    return params


def reference_forward(x, params):
    h = x
    for (w, b) in params[:-1]:
        h = h @ w.T + b
        h = jnp.where(h > 0, h, jnp.exp(h) - 1.0)
    w, b = params[-1]
    z = h @ w.T + b
    return jnp.minimum(z, 0.0) - jnp.log1p(jnp.exp(-jnp.abs(z)))


if __name__ == "__main__":
    # TODO(synk): Dropout is modeled in eval mode (identity); training-mode RNG masking not implemented.
    batch = 8
    input_dim = 32
    layers_config = [64, 32]

    key = jax.random.PRNGKey(0)
    key, kx = jax.random.split(key)
    x = jax.random.normal(kx, (batch, input_dim), jnp.float32)
    params = init_params(key, input_dim, layers_config)

    ref = reference_forward(x, params)

    # f32 path (tight check).
    out_f32 = jax.block_until_ready(loglikelihood_mlp_forward(x, params))
    assert out_f32.shape == (batch, 1)
    assert jnp.allclose(out_f32, ref, atol=1e-5, rtol=1e-5)

    # bf16 matmul path (f32 MXU accumulation; bf16 elementwise only on chips
    # with a bf16 VPU/EUP) -- looser tolerance.
    out_bf16 = jax.block_until_ready(
        loglikelihood_mlp_forward(x, params, compute_dtype=jnp.bfloat16))
    assert out_bf16.shape == (batch, 1)
    assert jnp.allclose(out_bf16, ref, atol=1e-1, rtol=1e-1)

    # Multi-tile grid + ragged batch (exercises 128-aligned padding, even
    # tile-count rounding for megacore and the lane-dense slab output).
    batch2 = 300
    key, kx2 = jax.random.split(key)
    x2 = jax.random.normal(kx2, (batch2, input_dim), jnp.float32)
    ref2 = reference_forward(x2, params)
    out2 = jax.block_until_ready(loglikelihood_mlp_forward(x2, params, tile_b=128))
    assert out2.shape == (batch2, 1)
    assert jnp.allclose(out2, ref2, atol=1e-5, rtol=1e-5)

    print("KERNEL_OK")
</pallas_src>

<mosaic_0001>
module attributes {stable_mosaic.version = 11 : i64} {
  func.func @_mlp_kernel(%arg0: i32, %arg1: memref<128x32xf32, #tpu.memory_space<vmem>>, %arg2: memref<64x32xf32, #tpu.memory_space<vmem>>, %arg3: memref<64x1xf32, #tpu.memory_space<vmem>>, %arg4: memref<32x64xf32, #tpu.memory_space<vmem>>, %arg5: memref<32x1xf32, #tpu.memory_space<vmem>>, %arg6: memref<1x32xf32, #tpu.memory_space<vmem>>, %arg7: memref<1x1xf32, #tpu.memory_space<vmem>>, %arg8: memref<1x128xf32, #tpu.memory_space<vmem>>) attributes {dimension_semantics = [#tpu.dimension_semantics<parallel>], iteration_bounds = array<i64: 1>, scalar_prefetch = 0 : i64, scratch_operands = 0 : i64, tpu.core_type = #tpu.core_type<tc>, window_params = [{transform_indices = @transform_0, window_bounds = array<i64: 128, 32>}, {pipeline_mode = #tpu.pipeline_mode<synchronous>, transform_indices = @transform_1, window_bounds = array<i64: 64, 32>}, {pipeline_mode = #tpu.pipeline_mode<synchronous>, transform_indices = @transform_2, window_bounds = array<i64: 64, 1>}, {pipeline_mode = #tpu.pipeline_mode<synchronous>, transform_indices = @transform_3, window_bounds = array<i64: 32, 64>}, {pipeline_mode = #tpu.pipeline_mode<synchronous>, transform_indices = @transform_4, window_bounds = array<i64: 32, 1>}, {pipeline_mode = #tpu.pipeline_mode<synchronous>, transform_indices = @transform_5, window_bounds = array<i64: 1, 32>}, {pipeline_mode = #tpu.pipeline_mode<synchronous>, transform_indices = @transform_6, window_bounds = array<i64: 1, 1>}, {transform_indices = @transform_7, window_bounds = array<i64: 1, 128>}]} {
    %c0 = arith.constant 0 : index
    %c0_0 = arith.constant 0 : index
    %0 = vector.load %arg1[%c0, %c0_0] : memref<128x32xf32, #tpu.memory_space<vmem>>, vector<128x32xf32>
    %c0_1 = arith.constant 0 : index
    %c0_2 = arith.constant 0 : index
    %1 = vector.load %arg2[%c0_1, %c0_2] : memref<64x32xf32, #tpu.memory_space<vmem>>, vector<64x32xf32>
    %c0_3 = arith.constant 0 : index
    %c0_4 = arith.constant 0 : index
    %2 = vector.load %arg3[%c0_3, %c0_4] : memref<64x1xf32, #tpu.memory_space<vmem>>, vector<64x1xf32>
    %cst = arith.constant dense<0.000000e+00> : vector<64x128xf32>
    %3 = tpu.matmul %1, %0, %cst {dimension_numbers = #tpu.dot_dimension_numbers<[1], [1], [0], [0], [0, 0, 1, 0], [], []>} : vector<64x32xf32>, vector<128x32xf32>, vector<64x128xf32> -> vector<64x128xf32>
    %4 = vector.broadcast %2 : vector<64x1xf32> to vector<64x128xf32>
    %5 = arith.addf %3, %4 : vector<64x128xf32>
    %cst_5 = arith.constant 0.000000e+00 : f32
    %6 = vector.broadcast %cst_5 : f32 to vector<64x128xf32>
    %7 = arith.cmpf ogt, %5, %6 : vector<64x128xf32>
    %8 = math.exp %5 : vector<64x128xf32>
    %cst_6 = arith.constant 1.000000e+00 : f32
    %9 = vector.broadcast %cst_6 : f32 to vector<64x128xf32>
    %10 = arith.subf %8, %9 : vector<64x128xf32>
    %11 = arith.select %7, %5, %10 : vector<64x128xi1>, vector<64x128xf32>
    %c0_7 = arith.constant 0 : index
    %c0_8 = arith.constant 0 : index
    %12 = vector.load %arg4[%c0_7, %c0_8] : memref<32x64xf32, #tpu.memory_space<vmem>>, vector<32x64xf32>
    %c0_9 = arith.constant 0 : index
    %c0_10 = arith.constant 0 : index
    %13 = vector.load %arg5[%c0_9, %c0_10] : memref<32x1xf32, #tpu.memory_space<vmem>>, vector<32x1xf32>
    %cst_11 = arith.constant dense<0.000000e+00> : vector<32x128xf32>
    %14 = tpu.matmul %12, %11, %cst_11 {dimension_numbers = #tpu.dot_dimension_numbers<[1], [0], [0], [1], [0, 0, 1, 1], [], []>} : vector<32x64xf32>, vector<64x128xf32>, vector<32x128xf32> -> vector<32x128xf32>
    %15 = vector.broadcast %13 : vector<32x1xf32> to vector<32x128xf32>
    %16 = arith.addf %14, %15 : vector<32x128xf32>
    %cst_12 = arith.constant 0.000000e+00 : f32
    %17 = vector.broadcast %cst_12 : f32 to vector<32x128xf32>
    %18 = arith.cmpf ogt, %16, %17 : vector<32x128xf32>
    %19 = math.exp %16 : vector<32x128xf32>
    %cst_13 = arith.constant 1.000000e+00 : f32
    %20 = vector.broadcast %cst_13 : f32 to vector<32x128xf32>
    %21 = arith.subf %19, %20 : vector<32x128xf32>
    %22 = arith.select %18, %16, %21 : vector<32x128xi1>, vector<32x128xf32>
    %c0_14 = arith.constant 0 : index
    %c0_15 = arith.constant 0 : index
    %23 = vector.load %arg6[%c0_14, %c0_15] : memref<1x32xf32, #tpu.memory_space<vmem>>, vector<1x32xf32>
    %c0_16 = arith.constant 0 : index
    %c0_17 = arith.constant 0 : index
    %24 = vector.load %arg7[%c0_16, %c0_17] : memref<1x1xf32, #tpu.memory_space<vmem>>, vector<1x1xf32>
    %cst_18 = arith.constant dense<0.000000e+00> : vector<1x128xf32>
    %25 = tpu.matmul %23, %22, %cst_18 {dimension_numbers = #tpu.dot_dimension_numbers<[1], [0], [0], [1], [0, 0, 1, 1], [], []>} : vector<1x32xf32>, vector<32x128xf32>, vector<1x128xf32> -> vector<1x128xf32>
    %26 = vector.broadcast %24 : vector<1x1xf32> to vector<1x128xf32>
    %27 = arith.addf %25, %26 : vector<1x128xf32>
    %cst_19 = arith.constant 0.000000e+00 : f32
    %28 = vector.broadcast %cst_19 : f32 to vector<1x128xf32>
    %29 = arith.minimumf %27, %28 : vector<1x128xf32>
    %30 = math.absf %27 : vector<1x128xf32>
    %cst_20 = arith.constant 0.000000e+00 : f32
    %31 = vector.broadcast %cst_20 : f32 to vector<1x128xf32>
    %32 = arith.subf %31, %30 : vector<1x128xf32>
    %33 = math.exp %32 : vector<1x128xf32>
    %34 = math.log1p %33 : vector<1x128xf32>
    %35 = arith.subf %29, %34 : vector<1x128xf32>
    %c0_21 = arith.constant 0 : index
    %c0_22 = arith.constant 0 : index
    %36 = vector.load %arg8[%c0_21, %c0_22] : memref<1x128xf32, #tpu.memory_space<vmem>>, vector<1x128xf32>
    tpu.vector_store %arg8[%c0_21, %c0_22], %35 {strides = array<i32>} : memref<1x128xf32, #tpu.memory_space<vmem>>, vector<1x128xf32>,
    return
  }
  func.func @transform_0(%arg0: i32) -> (i32, i32) {
    %c0_i32 = arith.constant 0 : i32
    %c0_i32_0 = arith.constant 0 : i32
    return %arg0, %c0_i32 : i32, i32
  }
  func.func @transform_1(%arg0: i32) -> (i32, i32) {
    %c0_i32 = arith.constant 0 : i32
    %c0_i32_0 = arith.constant 0 : i32
    %c0_i32_1 = arith.constant 0 : i32
    return %c0_i32, %c0_i32_0 : i32, i32
  }
  func.func @transform_2(%arg0: i32) -> (i32, i32) {
    %c0_i32 = arith.constant 0 : i32
    %c0_i32_0 = arith.constant 0 : i32
    %c0_i32_1 = arith.constant 0 : i32
    return %c0_i32, %c0_i32_0 : i32, i32
  }
  func.func @transform_3(%arg0: i32) -> (i32, i32) {
    %c0_i32 = arith.constant 0 : i32
    %c0_i32_0 = arith.constant 0 : i32
    %c0_i32_1 = arith.constant 0 : i32
    return %c0_i32, %c0_i32_0 : i32, i32
  }
  func.func @transform_4(%arg0: i32) -> (i32, i32) {
    %c0_i32 = arith.constant 0 : i32
    %c0_i32_0 = arith.constant 0 : i32
    %c0_i32_1 = arith.constant 0 : i32
    return %c0_i32, %c0_i32_0 : i32, i32
  }
  func.func @transform_5(%arg0: i32) -> (i32, i32) {
    %c0_i32 = arith.constant 0 : i32
    %c0_i32_0 = arith.constant 0 : i32
    %c0_i32_1 = arith.constant 0 : i32
    return %c0_i32, %c0_i32_0 : i32, i32
  }
  func.func @transform_6(%arg0: i32) -> (i32, i32) {
    %c0_i32 = arith.constant 0 : i32
    %c0_i32_0 = arith.constant 0 : i32
    %c0_i32_1 = arith.constant 0 : i32
    return %c0_i32, %c0_i32_0 : i32, i32
  }
  func.func @transform_7(%arg0: i32) -> (i32, i32) {
    %c0_i32 = arith.constant 0 : i32
    %c0_i32_0 = arith.constant 0 : i32
    return %c0_i32, %arg0 : i32, i32
  }
}

</mosaic_0001>

<llo_original>
// kernel: tpu_custom_call.1
$region0: #{tpu_custom_call.1}
  #allocation0 [shape = 'u32[]', space=smem, size = 0x4, offset = 0x4, fixed_abs, tag = 'smem constant byte address 0x4 - core index']
  #allocation1 [shape = 'u32[144,128]{1,0:T(1,128)}', space=vmem, size = 0x12000, scoped, tag = 'internal scratch']
  #allocation2 [shape = 'f32[1,1]{1,0:T(1,128)S(1)}', space=vmem, size = 0x200, scoped, tag = 'scoped memory for tpu_custom_call.1']
  %s0 = inlined_call_operand.vmem [shape: f32[128,32], index: 0, kind: input, shape index: {}]
  %s1 = inlined_call_operand.vmem [shape: f32[64,32], index: 1, kind: input, shape index: {}]
  %s2 = inlined_call_operand.vmem [shape: f32[64,1], index: 2, kind: input, shape index: {}]
  %s3 = inlined_call_operand.vmem [shape: f32[32,64], index: 3, kind: input, shape index: {}]
  %s4 = inlined_call_operand.vmem [shape: f32[32,1], index: 4, kind: input, shape index: {}]
  %s5 = inlined_call_operand.vmem [shape: f32[1,32], index: 5, kind: input, shape index: {}]
  %s6 = inlined_call_operand.<no memory space> [shape: f32[1,1], index: 6, kind: input, shape index: {}]
  %s7 = inlined_call_operand.hbm [shape: f32[1,128], index: 7, kind: output, shape index: {}]
  %s8 = sld [smem:[#allocation0]]
  $region38: #{tpu_custom_call.1} parent=0
    _
  %s10 = ssub.s32 1, %s8
  %s11 = scalar_select 0, %s10, %s8
  %v12 = vstv %s6
  %13 = vst [vmem:[#allocation2] sm:$0x1] %v12
  $region1: #{tpu_custom_call.1} parent=0
    #allocation3 [shape = 'u8[512]{0}', space=vmem, size = 0x400, scoped, tag = 'output window, operand 0, single buffered']
    #allocation4 [shape = 's32[1]{0}', space=sflag, size = 0x4, scoped, tag = 'scoped memory for tpu_custom_call.1']
    %14 = vsyncpa [#allocation4], 0
    // Predicated region
    $region2: #{tpu_custom_call.1} parent=1 // pred_check
      _
    $region3: #{tpu_custom_call.1} parent=1 // pred_check_branch
      %16 = sbr.rel (0) target = $region5
    $region4: #{tpu_custom_call.1} parent=1 // pred_region
      _
    $region5: #{tpu_custom_call.1} parent=1 // pred_fallthru
      _
    // Predicated region
    $region6: #{tpu_custom_call.1} parent=1 // pred_check
      _
    $region7: #{tpu_custom_call.1} parent=1 // pred_check_branch
      %18 = sbr.rel (0) target = $region9
    $region8: #{tpu_custom_call.1} parent=1 // pred_region
      _
    $region9: #{tpu_custom_call.1} parent=1 // pred_fallthru
      _
    // Predicated region
    $region10: #{tpu_custom_call.1} parent=1 // pred_check
      _
    $region11: #{tpu_custom_call.1} parent=1 // pred_check_branch
      %20 = sbr.rel (0) target = $region13
    $region12: #{tpu_custom_call.1} parent=1 // pred_region
      _
    $region13: #{tpu_custom_call.1} parent=1 // pred_fallthru
      _
    // Predicated region
    $region14: #{tpu_custom_call.1} parent=1 // pred_check
      _
    $region15: #{tpu_custom_call.1} parent=1 // pred_check_branch
      %22 = sbr.rel (0) target = $region17
    $region16: #{tpu_custom_call.1} parent=1 // pred_region
      _
    $region17: #{tpu_custom_call.1} parent=1 // pred_fallthru
      _
    // Predicated region
    $region18: #{tpu_custom_call.1} parent=1 // pred_check
      _
    $region19: #{tpu_custom_call.1} parent=1 // pred_check_branch
      %24 = sbr.rel (0) target = $region21
    $region20: #{tpu_custom_call.1} parent=1 // pred_region
      _
    $region21: #{tpu_custom_call.1} parent=1 // pred_fallthru
      _
    // Predicated region
    $region22: #{tpu_custom_call.1} parent=1 // pred_check
      _
    $region23: #{tpu_custom_call.1} parent=1 // pred_check_branch
      %26 = sbr.rel (0) target = $region25
    $region24: #{tpu_custom_call.1} parent=1 // pred_region
      _
    $region25: #{tpu_custom_call.1} parent=1 // pred_fallthru
      _
    // Predicated region
    $region26: #{tpu_custom_call.1} parent=1 // pred_check
      _
    $region27: #{tpu_custom_call.1} parent=1 // pred_check_branch
      %28 = sbr.rel (0) target = $region29
    $region28: #{tpu_custom_call.1} parent=1 // pred_region
      _
    $region29: #{tpu_custom_call.1} parent=1 // pred_fallthru
      _
    %v29 = vld [vmem:[%s0] sm:$0xff]
    %v30 = vld [vmem:[%s0 + $0x8] sm:$0xff]
    %v31 = vld [vmem:[%s0 + $0x10] sm:$0xff]
    %v32 = vld [vmem:[%s0 + $0x18] sm:$0xff]
    %v33 = vld [vmem:[%s0 + $0x20] sm:$0xff]
    %v34 = vld [vmem:[%s0 + $0x28] sm:$0xff]
    %v35 = vld [vmem:[%s0 + $0x30] sm:$0xff]
    %v36 = vld [vmem:[%s0 + $0x38] sm:$0xff]
    %v37 = vld [vmem:[%s0 + $0x40] sm:$0xff]
    %v38 = vld [vmem:[%s0 + $0x48] sm:$0xff]
    %v39 = vld [vmem:[%s0 + $0x50] sm:$0xff]
    %v40 = vld [vmem:[%s0 + $0x58] sm:$0xff]
    %v41 = vld [vmem:[%s0 + $0x60] sm:$0xff]
    %v42 = vld [vmem:[%s0 + $0x68] sm:$0xff]
    %v43 = vld [vmem:[%s0 + $0x70] sm:$0xff]
    %v44 = vld [vmem:[%s0 + $0x78] sm:$0xff]
    %v45 = vld [vmem:[%s1] sm:$0xff]
    %v46 = vld [vmem:[%s1 + $0x8] sm:$0xff]
    %v47 = vld [vmem:[%s1 + $0x10] sm:$0xff]
    %v48 = vld [vmem:[%s1 + $0x18] sm:$0xff]
    %v49 = vld [vmem:[%s1 + $0x20] sm:$0xff]
    %v50 = vld [vmem:[%s1 + $0x28] sm:$0xff]
    %v51 = vld [vmem:[%s1 + $0x30] sm:$0xff]
    %v52 = vld [vmem:[%s1 + $0x38] sm:$0xff]
    %v53 = vld [vmem:[%s2] sm:$0xff]
    %v54 = vld [vmem:[%s2 + $0x8] sm:$0xff]
    %v55 = vld [vmem:[%s2 + $0x10] sm:$0xff]
    %v56 = vld [vmem:[%s2 + $0x18] sm:$0xff]
    %v57 = vld [vmem:[%s2 + $0x20] sm:$0xff]
    %v58 = vld [vmem:[%s2 + $0x28] sm:$0xff]
    %v59 = vld [vmem:[%s2 + $0x30] sm:$0xff]
    %v60 = vld [vmem:[%s2 + $0x38] sm:$0xff]
    %62 = vset.pattern.permute.xlu0 0
    %63 = vperm.xlu0 %62, %v53
    %v64 = vpop.permute.xlu0 %63
    %67 = vset.pattern.permute.xlu0 0
    %68 = vperm.xlu0 %67, %v54
    %v69 = vpop.permute.xlu0 %68
    %72 = vset.pattern.permute.xlu0 0
    %73 = vperm.xlu0 %72, %v55
    %v74 = vpop.permute.xlu0 %73
    %77 = vset.pattern.permute.xlu0 0
    %78 = vperm.xlu0 %77, %v56
    %v79 = vpop.permute.xlu0 %78
    %82 = vset.pattern.permute.xlu0 0
    %83 = vperm.xlu0 %82, %v57
    %v84 = vpop.permute.xlu0 %83
    %87 = vset.pattern.permute.xlu0 0
    %88 = vperm.xlu0 %87, %v58
    %v89 = vpop.permute.xlu0 %88
    %92 = vset.pattern.permute.xlu0 0
    %93 = vperm.xlu0 %92, %v59
    %v94 = vpop.permute.xlu0 %93
    %97 = vset.pattern.permute.xlu0 0
    %98 = vperm.xlu0 %97, %v60
    %v99 = vpop.permute.xlu0 %98
    %vm101 = vcmask 261120
    %v103 = vsel %vm101, %v45, 0
    %v106 = vsel %vm101, %v46, 0
    %v109 = vsel %vm101, %v47, 0
    %v112 = vsel %vm101, %v48, 0
    %v115 = vsel %vm101, %v49, 0
    %v118 = vsel %vm101, %v50, 0
    %v121 = vsel %vm101, %v51, 0
    %v124 = vsel %vm101, %v52, 0
    %v127 = vsel %vm101, %v29, 0
    %v130 = vsel %vm101, %v30, 0
    %v133 = vsel %vm101, %v31, 0
    %v136 = vsel %vm101, %v32, 0
    %v139 = vsel %vm101, %v33, 0
    %v142 = vsel %vm101, %v34, 0
    %v145 = vsel %vm101, %v35, 0
    %v148 = vsel %vm101, %v36, 0
    %v151 = vsel %vm101, %v37, 0
    %v154 = vsel %vm101, %v38, 0
    %v157 = vsel %vm101, %v39, 0
    %v160 = vsel %vm101, %v40, 0
    %v163 = vsel %vm101, %v41, 0
    %v166 = vsel %vm101, %v42, 0
    %v169 = vsel %vm101, %v43, 0
    %v172 = vsel %vm101, %v44, 0
    %174 = vmatprep.subr.mxu0 0.0
    %175 = vmatpush1.xpose.msra.mxu0 %v127
    %176 = vmatprep.subr.mxu0 0.0
    %177 = vmatpush1.xpose.msra.mxu0 %v130
    %178 = vmatprep.subr.mxu0 0.0
    %179 = vmatpush1.xpose.msra.mxu0 %v133
    %180 = vmatprep.subr.mxu0 0.0
    %181 = vmatpush1.xpose.msra.mxu0 %v136
    %182 = vmatprep.subr.mxu0 0.0
    %183 = vmatpush1.xpose.msra.mxu0 %v139
    %184 = vmatprep.subr.mxu0 0.0
    %185 = vmatpush1.xpose.msra.mxu0 %v142
    %186 = vmatprep.subr.mxu0 0.0
    %187 = vmatpush1.xpose.msra.mxu0 %v145
    %188 = vmatprep.subr.mxu0 0.0
    %189 = vmatpush1.xpose.msra.mxu0 %v148
    %190 = vmatprep.subr.mxu0 0.0
    %191 = vmatpush1.xpose.msra.mxu0 %v151
    %192 = vmatprep.subr.mxu0 0.0
    %193 = vmatpush1.xpose.msra.mxu0 %v154
    %194 = vmatprep.subr.mxu0 0.0
    %195 = vmatpush1.xpose.msra.mxu0 %v157
    %196 = vmatprep.subr.mxu0 0.0
    %197 = vmatpush1.xpose.msra.mxu0 %v160
    %198 = vmatprep.subr.mxu0 0.0
    %199 = vmatpush1.xpose.msra.mxu0 %v163
    %200 = vmatprep.subr.mxu0 0.0
    %201 = vmatpush1.xpose.msra.mxu0 %v166
    %202 = vmatprep.subr.mxu0 0.0
    %203 = vmatpush1.xpose.msra.mxu0 %v169
    %204 = vmatprep.subr.mxu0 0.0
    %205 = vmatpush1.xpose.msra.mxu0 %v172
    %206 = vmatprep.subr.mxu0 0.0
    %207 = vmatpush1.xpose.msra.mxu0 0.0
    %208 = vmatprep.subr.mxu0 0.0
    %209 = vmatpush1.xpose.msra.mxu0 0.0
    %210 = vmatprep.subr.mxu0 0.0
    %211 = vmatpush1.xpose.msra.mxu0 0.0
    %212 = vmatprep.subr.mxu0 0.0
    %213 = vmatpush1.xpose.msra.mxu0 0.0
    %214 = vmatprep.subr.mxu0 0.0
    %215 = vmatpush1.xpose.msra.mxu0 0.0
    %216 = vmatprep.subr.mxu0 0.0
    %217 = vmatpush1.xpose.msra.mxu0 0.0
    %218 = vmatprep.subr.mxu0 0.0
    %219 = vmatpush1.xpose.msra.mxu0 0.0
    %220 = vmatprep.subr.mxu0 0.0
    %221 = vmatpush1.xpose.msra.mxu0 0.0
    %222 = vmatprep.subr.mxu0 0.0
    %223 = vmatpush1.xpose.msra.mxu0 0.0
    %224 = vmatprep.subr.mxu0 0.0
    %225 = vmatpush1.xpose.msra.mxu0 0.0
    %226 = vmatprep.subr.mxu0 0.0
    %227 = vmatpush1.xpose.msra.mxu0 0.0
    %228 = vmatprep.subr.mxu0 0.0
    %229 = vmatpush1.xpose.msra.mxu0 0.0
    %230 = vmatprep.subr.mxu0 0.0
    %231 = vmatpush1.xpose.msra.mxu0 0.0
    %232 = vmatprep.subr.mxu0 0.0
    %233 = vmatpush1.xpose.msra.mxu0 0.0
    %234 = vmatprep.subr.mxu0 0.0
    %235 = vmatpush1.xpose.msra.mxu0 0.0
    %236 = vmatprep.subr.mxu0 0.0
    %237 = vmatpush1.xpose.msra.mxu0 0.0
    %238 = vmatprep.mubr.f32.mxu0 0.0
    %239 = vmatmul.mubr.f32.gmra.mrb[0].mxu0 %v103
    %v240 = vpop.f32.mrb[0].mxu0
    %v241 = vadd.f32 %v64, %v240
    %v242 = vpop.f32.mrb[0].mxu0
    %243 = vmatprep.mubr.f32.mxu0 0.0
    %244 = vmatmul.mubr.f32.gmra.mrb[0].mxu0 %v106
    %v245 = vpop.f32.mrb[0].mxu0
    %v246 = vadd.f32 %v69, %v245
    %v247 = vpop.f32.mrb[0].mxu0
    %248 = vmatprep.mubr.f32.mxu0 0.0
    %249 = vmatmul.mubr.f32.gmra.mrb[0].mxu0 %v109
    %v250 = vpop.f32.mrb[0].mxu0
    %v251 = vadd.f32 %v74, %v250
    %v252 = vpop.f32.mrb[0].mxu0
    %253 = vmatprep.mubr.f32.mxu0 0.0
    %254 = vmatmul.mubr.f32.gmra.mrb[0].mxu0 %v112
    %v255 = vpop.f32.mrb[0].mxu0
    %v256 = vadd.f32 %v79, %v255
    %v257 = vpop.f32.mrb[0].mxu0
    %258 = vmatprep.mubr.f32.mxu0 0.0
    %259 = vmatmul.mubr.f32.gmra.mrb[0].mxu0 %v115
    %v260 = vpop.f32.mrb[0].mxu0
    %v261 = vadd.f32 %v84, %v260
    %v262 = vpop.f32.mrb[0].mxu0
    %263 = vmatprep.mubr.f32.mxu0 0.0
    %264 = vmatmul.mubr.f32.gmra.mrb[0].mxu0 %v118
    %v265 = vpop.f32.mrb[0].mxu0
    %v266 = vadd.f32 %v89, %v265
    %v267 = vpop.f32.mrb[0].mxu0
    %268 = vmatprep.mubr.f32.mxu0 0.0
    %269 = vmatmul.mubr.f32.gmra.mrb[0].mxu0 %v121
    %v270 = vpop.f32.mrb[0].mxu0
    %v271 = vadd.f32 %v94, %v270
    %v272 = vpop.f32.mrb[0].mxu0
    %273 = vmatprep.mubr.f32.mxu0 0.0
    %274 = vmatmul.mubr.f32.gmra.mrb[0].mxu0 %v124
    %v275 = vpop.f32.mrb[0].mxu0
    %v276 = vadd.f32 %v99, %v275
    %v277 = vpop.f32.mrb[0].mxu0
    %278 = vdwg.mxu0
    %vm279 = vcmp.gt.f32.partialorder %v241, 0.0
    %vm280 = vcmp.gt.f32.partialorder %v246, 0.0
    %vm281 = vcmp.gt.f32.partialorder %v251, 0.0
    %vm282 = vcmp.gt.f32.partialorder %v256, 0.0
    %vm283 = vcmp.gt.f32.partialorder %v261, 0.0
    %vm284 = vcmp.gt.f32.partialorder %v266, 0.0
    %vm285 = vcmp.gt.f32.partialorder %v271, 0.0
    %vm286 = vcmp.gt.f32.partialorder %v276, 0.0
    %v287 = vmul.f32 %v241, 1.442695
    %v288 = vpow.pop %v287
    %v289 = vmul.f32 %v246, 1.442695
    %v290 = vpow.pop %v289
    %v291 = vmul.f32 %v251, 1.442695
    %v292 = vpow.pop %v291
    %v293 = vmul.f32 %v256, 1.442695
    %v294 = vpow.pop %v293
    %v295 = vmul.f32 %v261, 1.442695
    %v296 = vpow.pop %v295
    %v297 = vmul.f32 %v266, 1.442695
    %v298 = vpow.pop %v297
    %v299 = vmul.f32 %v271, 1.442695
    %v300 = vpow.pop %v299
    %v301 = vmul.f32 %v276, 1.442695
    %v302 = vpow.pop %v301
    %v303 = vsub.f32 %v288, 1.0
    %v304 = vsub.f32 %v290, 1.0
    %v305 = vsub.f32 %v292, 1.0
    %v306 = vsub.f32 %v294, 1.0
    %v307 = vsub.f32 %v296, 1.0
    %v308 = vsub.f32 %v298, 1.0
    %v309 = vsub.f32 %v300, 1.0
    %v310 = vsub.f32 %v302, 1.0
    %v311 = vsel %vm279, %v241, %v303
    %v312 = vsel %vm280, %v246, %v304
    %v313 = vsel %vm281, %v251, %v305
    %v314 = vsel %vm282, %v256, %v306
    %v315 = vsel %vm283, %v261, %v307
    %v316 = vsel %vm284, %v266, %v308
    %v317 = vsel %vm285, %v271, %v309
    %v318 = vsel %vm286, %v276, %v310
    %v319 = vld [vmem:[%s3] sm:$0xff]
    %v320 = vld [vmem:[%s3 + $0x8] sm:$0xff]
    %v321 = vld [vmem:[%s3 + $0x10] sm:$0xff]
    %v322 = vld [vmem:[%s3 + $0x18] sm:$0xff]
    %v323 = vld [vmem:[%s4] sm:$0xff]
    %v324 = vld [vmem:[%s4 + $0x8] sm:$0xff]
    %v325 = vld [vmem:[%s4 + $0x10] sm:$0xff]
    %v326 = vld [vmem:[%s4 + $0x18] sm:$0xff]
    %328 = vset.pattern.permute.xlu0 0
    %329 = vperm.xlu0 %328, %v323
    %v330 = vpop.permute.xlu0 %329
    %333 = vset.pattern.permute.xlu0 0
    %334 = vperm.xlu0 %333, %v324
    %v335 = vpop.permute.xlu0 %334
    %338 = vset.pattern.permute.xlu0 0
    %339 = vperm.xlu0 %338, %v325
    %v340 = vpop.permute.xlu0 %339
    %343 = vset.pattern.permute.xlu0 0
    %344 = vperm.xlu0 %343, %v326
    %v345 = vpop.permute.xlu0 %344
    %vm347 = vcmask 523264
    %v349 = vsel %vm347, %v319, 0
    %v352 = vsel %vm347, %v320, 0
    %v355 = vsel %vm347, %v321, 0
    %v358 = vsel %vm347, %v322, 0
    %360 = vmatprep.subr.mxu0 0.0
    %361 = vmatpush1.msra.mxu0 %v311
    %362 = vmatprep.subr.mxu0 0.0
    %363 = vmatpush1.msra.mxu0 %v312
    %364 = vmatprep.subr.mxu0 0.0
    %365 = vmatpush1.msra.mxu0 %v313
    %366 = vmatprep.subr.mxu0 0.0
    %367 = vmatpush1.msra.mxu0 %v314
    %368 = vmatprep.subr.mxu0 0.0
    %369 = vmatpush1.msra.mxu0 %v315
    %370 = vmatprep.subr.mxu0 0.0
    %371 = vmatpush1.msra.mxu0 %v316
    %372 = vmatprep.subr.mxu0 0.0
    %373 = vmatpush1.msra.mxu0 %v317
    %374 = vmatprep.subr.mxu0 0.0
    %375 = vmatpush1.msra.mxu0 %v318
    %376 = vmatprep.subr.mxu0 0.0
    %377 = vmatpush1.msra.mxu0 0.0
    %378 = vmatprep.subr.mxu0 0.0
    %379 = vmatpush1.msra.mxu0 0.0
    %380 = vmatprep.subr.mxu0 0.0
    %381 = vmatpush1.msra.mxu0 0.0
    %382 = vmatprep.subr.mxu0 0.0
    %383 = vmatpush1.msra.mxu0 0.0
    %384 = vmatprep.subr.mxu0 0.0
    %385 = vmatpush1.msra.mxu0 0.0
    %386 = vmatprep.subr.mxu0 0.0
    %387 = vmatpush1.msra.mxu0 0.0
    %388 = vmatprep.subr.mxu0 0.0
    %389 = vmatpush1.msra.mxu0 0.0
    %390 = vmatprep.subr.mxu0 0.0
    %391 = vmatpush1.msra.mxu0 0.0
    %392 = vmatprep.subr.mxu0 0.0
    %393 = vmatpush1.msra.mxu0 0.0
    %394 = vmatprep.subr.mxu0 0.0
    %395 = vmatpush1.msra.mxu0 0.0
    %396 = vmatprep.subr.mxu0 0.0
    %397 = vmatpush1.msra.mxu0 0.0
    %398 = vmatprep.subr.mxu0 0.0
    %399 = vmatpush1.msra.mxu0 0.0
    %400 = vmatprep.subr.mxu0 0.0
    %401 = vmatpush1.msra.mxu0 0.0
    %402 = vmatprep.subr.mxu0 0.0
    %403 = vmatpush1.msra.mxu0 0.0
    %404 = vmatprep.subr.mxu0 0.0
    %405 = vmatpush1.msra.mxu0 0.0
    %406 = vmatprep.subr.mxu0 0.0
    %407 = vmatpush1.msra.mxu0 0.0
    %408 = vmatprep.subr.mxu0 0.0
    %409 = vmatpush1.msra.mxu0 0.0
    %410 = vmatprep.subr.mxu0 0.0
    %411 = vmatpush1.msra.mxu0 0.0
    %412 = vmatprep.subr.mxu0 0.0
    %413 = vmatpush1.msra.mxu0 0.0
    %414 = vmatprep.subr.mxu0 0.0
    %415 = vmatpush1.msra.mxu0 0.0
    %416 = vmatprep.subr.mxu0 0.0
    %417 = vmatpush1.msra.mxu0 0.0
    %418 = vmatprep.subr.mxu0 0.0
    %419 = vmatpush1.msra.mxu0 0.0
    %420 = vmatprep.subr.mxu0 0.0
    %421 = vmatpush1.msra.mxu0 0.0
    %422 = vmatprep.subr.mxu0 0.0
    %423 = vmatpush1.msra.mxu0 0.0
    %424 = vmatprep.mubr.f32.mxu0 0.0
    %425 = vmatmul.mubr.f32.gmra.mrb[0].mxu0 %v349
    %v426 = vpop.f32.mrb[0].mxu0
    %v427 = vadd.f32 %v330, %v426
    %v428 = vpop.f32.mrb[0].mxu0
    %429 = vmatprep.mubr.f32.mxu0 0.0
    %430 = vmatmul.mubr.f32.gmra.mrb[0].mxu0 %v352
    %v431 = vpop.f32.mrb[0].mxu0
    %v432 = vadd.f32 %v335, %v431
    %v433 = vpop.f32.mrb[0].mxu0
    %434 = vmatprep.mubr.f32.mxu0 0.0
    %435 = vmatmul.mubr.f32.gmra.mrb[0].mxu0 %v355
    %v436 = vpop.f32.mrb[0].mxu0
    %v437 = vadd.f32 %v340, %v436
    %v438 = vpop.f32.mrb[0].mxu0
    %439 = vmatprep.mubr.f32.mxu0 0.0
    %440 = vmatmul.mubr.f32.gmra.mrb[0].mxu0 %v358
    %v441 = vpop.f32.mrb[0].mxu0
    %v442 = vadd.f32 %v345, %v441
    %v443 = vpop.f32.mrb[0].mxu0
    %444 = vdwg.mxu0
    %vm445 = vcmp.gt.f32.partialorder %v427, 0.0
    %vm446 = vcmp.gt.f32.partialorder %v432, 0.0
    %vm447 = vcmp.gt.f32.partialorder %v437, 0.0
    %vm448 = vcmp.gt.f32.partialorder %v442, 0.0
    %v449 = vmul.f32 %v427, 1.442695
    %v450 = vpow.pop %v449
    %v451 = vmul.f32 %v432, 1.442695
    %v452 = vpow.pop %v451
    %v453 = vmul.f32 %v437, 1.442695
    %v454 = vpow.pop %v453
    %v455 = vmul.f32 %v442, 1.442695
    %v456 = vpow.pop %v455
    %v457 = vsub.f32 %v450, 1.0
    %v458 = vsub.f32 %v452, 1.0
    %v459 = vsub.f32 %v454, 1.0
    %v460 = vsub.f32 %v456, 1.0
    %v461 = vsel %vm445, %v427, %v457
    %v462 = vsel %vm446, %v432, %v458
    %v463 = vsel %vm447, %v437, %v459
    %v464 = vsel %vm448, %v442, %v460
    %v465 = vld [vmem:[%s5] sm:$0x1]
    %v466 = vld [vmem:[#allocation2] sm:$0x1]
    %468 = vset.pattern.permute.xlu0 0
    %469 = vperm.xlu0 %468, %v466
    %v470 = vpop.permute.xlu0 %469
    %v472 = vlaneseq
    %v473 = vshrl.u32 %v472, 7
    %v474 = vsub.s32 0, %v473
    %v475 = vrot.slane %v470, %v474
    %v477 = vsel %vm101, %v465, 0
    %479 = vmatprep.subr.mxu0 0.0
    %480 = vmatpush1.msra.mxu0 %v461
    %481 = vmatprep.subr.mxu0 0.0
    %482 = vmatpush1.msra.mxu0 %v462
    %483 = vmatprep.subr.mxu0 0.0
    %484 = vmatpush1.msra.mxu0 %v463
    %485 = vmatprep.subr.mxu0 0.0
    %486 = vmatpush1.msra.mxu0 %v464
    %487 = vmatprep.subr.mxu0 0.0
    %488 = vmatpush1.msra.mxu0 0.0
    %489 = vmatprep.subr.mxu0 0.0
    %490 = vmatpush1.msra.mxu0 0.0
    %491 = vmatprep.subr.mxu0 0.0
    %492 = vmatpush1.msra.mxu0 0.0
    %493 = vmatprep.subr.mxu0 0.0
    %494 = vmatpush1.msra.mxu0 0.0
    %495 = vmatprep.subr.mxu0 0.0
    %496 = vmatpush1.msra.mxu0 0.0
    %497 = vmatprep.subr.mxu0 0.0
    %498 = vmatpush1.msra.mxu0 0.0
    %499 = vmatprep.subr.mxu0 0.0
    %500 = vmatpush1.msra.mxu0 0.0
    %501 = vmatprep.subr.mxu0 0.0
    %502 = vmatpush1.msra.mxu0 0.0
    %503 = vmatprep.subr.mxu0 0.0
    %504 = vmatpush1.msra.mxu0 0.0
    %505 = vmatprep.subr.mxu0 0.0
    %506 = vmatpush1.msra.mxu0 0.0
    %507 = vmatprep.subr.mxu0 0.0
    %508 = vmatpush1.msra.mxu0 0.0
    %509 = vmatprep.subr.mxu0 0.0
    %510 = vmatpush1.msra.mxu0 0.0
    %511 = vmatprep.subr.mxu0 0.0
    %512 = vmatpush1.msra.mxu0 0.0
    %513 = vmatprep.subr.mxu0 0.0
    %514 = vmatpush1.msra.mxu0 0.0
    %515 = vmatprep.subr.mxu0 0.0
    %516 = vmatpush1.msra.mxu0 0.0
    %517 = vmatprep.subr.mxu0 0.0
    %518 = vmatpush1.msra.mxu0 0.0
    %519 = vmatprep.subr.mxu0 0.0
    %520 = vmatpush1.msra.mxu0 0.0
    %521 = vmatprep.subr.mxu0 0.0
    %522 = vmatpush1.msra.mxu0 0.0
    %523 = vmatprep.subr.mxu0 0.0
    %524 = vmatpush1.msra.mxu0 0.0
    %525 = vmatprep.subr.mxu0 0.0
    %526 = vmatpush1.msra.mxu0 0.0
    %527 = vmatprep.subr.mxu0 0.0
    %528 = vmatpush1.msra.mxu0 0.0
    %529 = vmatprep.subr.mxu0 0.0
    %530 = vmatpush1.msra.mxu0 0.0
    %531 = vmatprep.subr.mxu0 0.0
    %532 = vmatpush1.msra.mxu0 0.0
    %533 = vmatprep.subr.mxu0 0.0
    %534 = vmatpush1.msra.mxu0 0.0
    %535 = vmatprep.subr.mxu0 0.0
    %536 = vmatpush1.msra.mxu0 0.0
    %537 = vmatprep.subr.mxu0 0.0
    %538 = vmatpush1.msra.mxu0 0.0
    %539 = vmatprep.subr.mxu0 0.0
    %540 = vmatpush1.msra.mxu0 0.0
    %541 = vmatprep.subr.mxu0 0.0
    %542 = vmatpush1.msra.mxu0 0.0
    %543 = vmatprep.mubr.f32.mxu0 0.0
    %544 = vmatmul.mubr.f32.gmra.mrb[0].mxu0 %v477
    %v545 = vpop.f32.mrb[0].mxu0
    %v546 = vadd.f32 %v475, %v545
    %v547 = vpop.f32.mrb[0].mxu0
    %548 = vdwg.mxu0
    %v549 = vmin.f32 %v546, 0.0
    %v550 = vand.u32 2147483647, %v546
    %v551 = vsub.f32 0.0, %v550
    %v552 = vmul.f32 %v551, 1.442695
    %v553 = vpow.pop %v552
    %v554 = vadd.f32 %v553, 1.0
    %v555 = vlog2.pop %v554
    %v556 = vmul.f32 %v555, 0.6931472
    %v557 = vmul.f32 -0.5, %v553
    %v558 = vadd.f32 %v557, 1.0
    %v559 = vmul.f32 %v558, %v553
    %v560 = vand.u32 2147483647, %v553
    %vm561 = vcmp.lt.f32.partialorder %v560, 0.0004427343
    %v562 = vsel %vm561, %v559, %v556
    %v563 = vsub.f32 %v549, %v562
    %564 = vst [vmem:[#allocation3] sm:$0x1] %v563
    // Predicated region
    $region30: #{tpu_custom_call.1} parent=1 // pred_check
      _
    $region31: #{tpu_custom_call.1} parent=1 // pred_check_branch
      %566 = sbr.rel (0) target = $region33
    $region32: #{tpu_custom_call.1} parent=1 // pred_region
      %s568 = ssub.s32 16, 16
      %569 = vsyncadd [#allocation4], %s568
      %s571 = sshll.u32 [#allocation3], 4
      %s572 = int_to_ptr.vmem [resolvable:$true] %s571
      %574 = dma.vmem_to_hbm [thread:$0]  %s572, 16, %s7, [#allocation4]
    $region33: #{tpu_custom_call.1} parent=1 // pred_fallthru
      _
    // Predicated region
    $region34: #{tpu_custom_call.1} parent=1 // pred_check
      _
    $region35: #{tpu_custom_call.1} parent=1 // pred_check_branch
      %576 = sbr.rel (0) target = $region37
    $region36: #{tpu_custom_call.1} parent=1 // pred_region
      %577 = dma.done [#allocation4], 16
    $region37: #{tpu_custom_call.1} parent=1 // pred_fallthru
      _
    %578 = vsyncpa [#allocation4], 1

</llo_original>
